<compile_context>
chip_gen: v6e
topology: v6e:2x2x1
jax: 0.10.0
libtpu: 0.0.40
codegen_flags: <defaults>
</compile_context>

<pallas_src>
import functools

import numpy as np
import jax
import jax.numpy as jnp
from jax import lax
from jax.experimental import pallas as pl
from jax.experimental.pallas import tpu as pltpu


def _round_up(x: int, m: int) -> int:
    return (x + m - 1) // m * m


def _vmem_limit_bytes() -> int:
    """48 MiB on 128 MiB parts (v5e/v6e), 32 MiB on 64 MiB parts (v7x)."""
    cap = 128 * 1024 * 1024
    try:
        info = pltpu.get_tpu_info()
        cap = int(getattr(info, "vmem_capacity_bytes", cap))
    except Exception:
        pass
    return min(48 * 1024 * 1024, cap // 2)


def _pick_tile_l(L, s_pad, d_pad, e_bytes, kv_buffers, budget):
    """Largest multiple-of-16 L tile (<=256) whose estimated VMEM footprint fits."""
    l16 = _round_up(L, 16)
    cands = []
    if l16 <= 256:
        cands.append(l16)
    for c in (256, 128, 64, 32, 16):
        if c < l16 and c not in cands:
            cands.append(c)

    def footprint(t):
        return (2 * t * d_pad * 2                    # q_map tile (bf16, double-buffered)
                + kv_buffers * 2 * s_pad * d_pad * 2  # K + V blocks (bf16)
                + 2 * t * s_pad * e_bytes             # E out tile (double-buffered)
                + 2 * t * d_pad * 4                   # C out tile (f32, double-buffered)
                + 3 * t * s_pad * 4)                  # e/p f32 temporaries

    tile = cands[-1]
    for c in cands:
        if footprint(c) <= budget:
            tile = c
            break
    return tile


def _mapping_kernel(emb_ref, w_ref, b_ref, q_ref, *, scale):
    # Conv1d(kernel_size=1) over the label axis == matmul + bias.
    # Contract on the last axes of both operands (no transpose -> straight to MXU).
    q = lax.dot_general(
        emb_ref[...], w_ref[...],
        dimension_numbers=(((1,), (1,)), ((), ())),
        preferred_element_type=jnp.float32,
    )  # [tile_l, D_pad]
    # Fold the 1/sqrt(D) energy scale into q_map here (done once, batch-invariant).
    q_ref[...] = ((q + b_ref[...]) * scale).astype(q_ref.dtype)


def _attention_kernel(q_ref, k_ref, v_ref, c_ref, e_ref, *, seq_len, s_pad):
    q = q_ref[...]    # [TILE_L, D_pad], pre-scaled, compute dtype (bf16)
    k = k_ref[0]      # [S_pad, D_pad], compute dtype
    v = v_ref[0]      # [S_pad, D_pad], compute dtype

    # E = q @ k^T, contracting last dims of both (no in-kernel transpose).
    e = lax.dot_general(
        q, k,
        dimension_numbers=(((1,), (1,)), ((), ())),
        preferred_element_type=jnp.float32,
    )  # [TILE_L, S_pad], f32
    e_ref[0] = e.astype(e_ref.dtype)   # raw energies (pad cols sliced off outside)

    # Mask padded key columns before the softmax (zero-padded K gives e=0, not -inf).
    if s_pad != seq_len:
        col = lax.broadcasted_iota(jnp.int32, (1, s_pad), 1)
        e = e + jnp.where(col < seq_len, 0.0, -1e30)

    # Softmax over the sequence axis with the normalization folded into the output:
    # un-normalized bf16 probs feed the MXU; the [TILE_L, D] f32 context is scaled by
    # the EUP reciprocal of the row sums (tile_l*D multiplies instead of tile_l*S).
    m = jnp.max(e, axis=-1, keepdims=True)
    p = jnp.exp(e - m)                                             # [TILE_L, S_pad] f32
    inv = pl.reciprocal(jnp.sum(p, axis=-1, keepdims=True), approx=True)
    ctx = jnp.dot(p.astype(v.dtype), v, preferred_element_type=jnp.float32)
    c_ref[0] = (ctx * inv).astype(c_ref.dtype)


def pretrained_attention(label_emb, w_conv, b_conv, K, V, *, scale=True,
                         compute_dtype=jnp.bfloat16, e_dtype=jnp.float32):
    """label_emb: [L, E], w_conv: [D, E], b_conv: [D], K/V: [B, S, D] -> (C, E)."""
    B, S, D = K.shape
    L, E = label_emb.shape
    scale_val = float(1.0 / np.sqrt(D)) if scale else 1.0   # uses the ORIGINAL D

    # Lane-dense padding: S (E's last dim) and D (C's last dim) -> multiples of 128.
    s_pad = _round_up(S, 128)
    d_pad = _round_up(D, 128)

    vmem_limit = _vmem_limit_bytes()
    budget = (vmem_limit * 3) // 4
    e_bytes = jnp.dtype(e_dtype).itemsize
    c_bytes_per_elem = jnp.dtype(compute_dtype).itemsize

    # Reduce K/V pipelining depth when their double-buffered blocks alone would eat
    # half of the VMEM budget (matters on v7x's 64 MiB part).
    kv_buffers = 2
    if 2 * 2 * (s_pad * d_pad * c_bytes_per_elem) > vmem_limit // 2:
        kv_buffers = 1

    tile_l = _pick_tile_l(L, s_pad, d_pad, e_bytes, kv_buffers, budget)
    l_pad = _round_up(L, tile_l)
    n_ltiles = l_pad // tile_l

    # --- pad parameters / inputs (zeros; padded rows/cols are sliced off) -------
    emb_p = label_emb if l_pad == L else jnp.pad(label_emb, ((0, l_pad - L), (0, 0)))
    w_p = w_conv if d_pad == D else jnp.pad(w_conv, ((0, d_pad - D), (0, 0)))
    b_p = (b_conv if d_pad == D else jnp.pad(b_conv, (0, d_pad - D))).reshape(1, d_pad)

    Kc = K.astype(compute_dtype)
    Vc = V.astype(compute_dtype)
    if (s_pad, d_pad) != (S, D):
        pad_cfg = ((0, 0), (0, s_pad - S), (0, d_pad - D))
        Kc = jnp.pad(Kc, pad_cfg)
        Vc = jnp.pad(Vc, pad_cfg)

    # --- Kernel 1: hoisted mapping layer, tiled over L (runs once, not per batch) --
    q_map = pl.pallas_call(
        functools.partial(_mapping_kernel, scale=scale_val),
        out_shape=jax.ShapeDtypeStruct((l_pad, d_pad), compute_dtype),
        grid=(n_ltiles,),
        in_specs=[
            pl.BlockSpec((tile_l, E), lambda i: (i, 0)),   # label embedding tile
            pl.BlockSpec((d_pad, E), lambda i: (0, 0)),    # conv1d (k=1) weight
            pl.BlockSpec((1, d_pad), lambda i: (0, 0)),    # conv1d bias
        ],
        out_specs=pl.BlockSpec((tile_l, d_pad), lambda i: (i, 0)),
        compiler_params=pltpu.CompilerParams(
            dimension_semantics=("parallel",),
            vmem_limit_bytes=vmem_limit,
        ),
    )(emb_p, w_p, b_p)

    # --- Grid order: keep the bigger operand resident, stream the smaller one. ----
    # (B, L) order re-DMAs q_map once per batch; (L, B) order re-DMAs K/V per L tile.
    extra_q_traffic = (B - 1) * l_pad * d_pad
    extra_kv_traffic = (n_ltiles - 1) * 2 * B * s_pad * d_pad
    l_major = extra_q_traffic > extra_kv_traffic

    kv_kwargs = {}
    if kv_buffers == 1:
        kv_kwargs["pipeline_mode"] = pl.Buffered(1)

    if l_major:
        grid = (n_ltiles, B)   # B innermost: q_map resident, K/V stream
        q_spec = pl.BlockSpec((tile_l, d_pad), lambda l, b: (l, 0))
        k_spec = pl.BlockSpec((1, s_pad, d_pad), lambda l, b: (b, 0, 0), **kv_kwargs)
        v_spec = pl.BlockSpec((1, s_pad, d_pad), lambda l, b: (b, 0, 0), **kv_kwargs)
        c_spec = pl.BlockSpec((1, tile_l, d_pad), lambda l, b: (b, l, 0))
        e_spec = pl.BlockSpec((1, tile_l, s_pad), lambda l, b: (b, l, 0))
    else:
        grid = (B, n_ltiles)   # L innermost: K/V resident per batch, q_map streams
        q_spec = pl.BlockSpec((tile_l, d_pad), lambda b, l: (l, 0))
        k_spec = pl.BlockSpec((1, s_pad, d_pad), lambda b, l: (b, 0, 0), **kv_kwargs)
        v_spec = pl.BlockSpec((1, s_pad, d_pad), lambda b, l: (b, 0, 0), **kv_kwargs)
        c_spec = pl.BlockSpec((1, tile_l, d_pad), lambda b, l: (b, l, 0))
        e_spec = pl.BlockSpec((1, tile_l, s_pad), lambda b, l: (b, l, 0))

    # --- Kernel 2: attention -----------------------------------------------------
    C, Emat = pl.pallas_call(
        functools.partial(_attention_kernel, seq_len=S, s_pad=s_pad),
        out_shape=(
            jax.ShapeDtypeStruct((B, l_pad, d_pad), jnp.float32),
            jax.ShapeDtypeStruct((B, l_pad, s_pad), e_dtype),
        ),
        grid=grid,
        in_specs=[q_spec, k_spec, v_spec],
        out_specs=(c_spec, e_spec),
        compiler_params=pltpu.CompilerParams(
            dimension_semantics=("parallel", "parallel"),
            vmem_limit_bytes=vmem_limit,
        ),
    )(q_map, Kc, Vc)

    # Slice off label / lane-density padding.
    C = C[:, :L, :D]
    Emat = Emat[:, :L, :S]
    return C, Emat


def _reference(label_emb, w_conv, b_conv, K, V, scale=True):
    q_map = label_emb @ w_conv.T + b_conv
    e = jnp.einsum("ld,bsd->bls", q_map, K)
    if scale:
        e = e / np.sqrt(K.shape[-1])
    a = jax.nn.softmax(e, axis=-1)
    c = jnp.einsum("bls,bsd->bld", a, V)
    return c, e


if __name__ == "__main__":
    # small, module-consistent shapes
    batch = 2
    num_labels = 10
    embedding_dim = 32
    latent_doc_dim = 32
    seq_len = 16
    embedding_scaling = 1.0

    key = jax.random.PRNGKey(0)
    k1, k2, k3, k4, k5 = jax.random.split(key, 5)

    # pretrained label embedding matrix (Doc2Vec stand-in), normalized as in __init__
    label_emb = jax.random.normal(k1, (num_labels, embedding_dim), dtype=jnp.float32)
    label_emb = label_emb - jnp.mean(label_emb)
    label_emb = label_emb / (jnp.std(label_emb) * embedding_scaling)

    # Conv1d(kernel_size=1) mapping-layer parameters, deterministic init
    fan_in = embedding_dim
    bound = 1.0 / np.sqrt(fan_in)
    w_conv = jax.random.uniform(
        k2, (latent_doc_dim, embedding_dim), minval=-bound, maxval=bound, dtype=jnp.float32
    )
    b_conv = jax.random.uniform(
        k3, (latent_doc_dim,), minval=-bound, maxval=bound, dtype=jnp.float32
    )

    # inputs K, V: [batch, seq_len, latent_doc_dim]
    K = jax.random.normal(k4, (batch, seq_len, latent_doc_dim), dtype=jnp.float32)
    V = jax.random.normal(k5, (batch, seq_len, latent_doc_dim), dtype=jnp.float32)

    C, Emat = pretrained_attention(label_emb, w_conv, b_conv, K, V, scale=True)
    jax.block_until_ready((C, Emat))

    # f32 reference; bf16 MXU operands + approx reciprocal loosen the tolerance.
    C_ref, E_ref = _reference(label_emb, w_conv, b_conv, K, V, scale=True)
    np.testing.assert_allclose(np.asarray(Emat), np.asarray(E_ref), rtol=2e-2, atol=2e-2)
    np.testing.assert_allclose(np.asarray(C), np.asarray(C_ref), rtol=2e-2, atol=2e-2)

    print("KERNEL_OK")
</pallas_src>

<mosaic_0001>
module attributes {stable_mosaic.version = 11 : i64} {
  func.func @_mapping_kernel(%arg0: i32, %arg1: memref<16x32xf32, #tpu.memory_space<vmem>>, %arg2: memref<128x32xf32, #tpu.memory_space<vmem>>, %arg3: memref<1x128xf32, #tpu.memory_space<vmem>>, %arg4: memref<16x128xbf16, #tpu.memory_space<vmem>>) attributes {dimension_semantics = [#tpu.dimension_semantics<parallel>], iteration_bounds = array<i64: 1>, scalar_prefetch = 0 : i64, scratch_operands = 0 : i64, tpu.core_type = #tpu.core_type<tc>, window_params = [{transform_indices = @transform_0, window_bounds = array<i64: 16, 32>}, {pipeline_mode = #tpu.pipeline_mode<synchronous>, transform_indices = @transform_1, window_bounds = array<i64: 128, 32>}, {pipeline_mode = #tpu.pipeline_mode<synchronous>, transform_indices = @transform_2, window_bounds = array<i64: 1, 128>}, {transform_indices = @transform_3, window_bounds = array<i64: 16, 128>}]} {
    %c0 = arith.constant 0 : index
    %c0_0 = arith.constant 0 : index
    %0 = vector.load %arg1[%c0, %c0_0] : memref<16x32xf32, #tpu.memory_space<vmem>>, vector<16x32xf32>
    %c0_1 = arith.constant 0 : index
    %c0_2 = arith.constant 0 : index
    %1 = vector.load %arg2[%c0_1, %c0_2] : memref<128x32xf32, #tpu.memory_space<vmem>>, vector<128x32xf32>
    %cst = arith.constant dense<0.000000e+00> : vector<16x128xf32>
    %2 = tpu.matmul %0, %1, %cst {dimension_numbers = #tpu.dot_dimension_numbers<[1], [1], [0], [0], [0, 0, 1, 0], [], []>} : vector<16x32xf32>, vector<128x32xf32>, vector<16x128xf32> -> vector<16x128xf32>
    %c0_3 = arith.constant 0 : index
    %c0_4 = arith.constant 0 : index
    %3 = vector.load %arg3[%c0_3, %c0_4] : memref<1x128xf32, #tpu.memory_space<vmem>>, vector<1x128xf32>
    %4 = vector.broadcast %3 : vector<1x128xf32> to vector<16x128xf32>
    %5 = arith.addf %2, %4 : vector<16x128xf32>
    %cst_5 = arith.constant 0.176776692 : f32
    %6 = vector.broadcast %cst_5 : f32 to vector<16x128xf32>
    %7 = arith.mulf %5, %6 : vector<16x128xf32>
    %8 = arith.truncf %7 : vector<16x128xf32> to vector<16x128xbf16>
    %c0_6 = arith.constant 0 : index
    %c0_7 = arith.constant 0 : index
    %9 = vector.load %arg4[%c0_6, %c0_7] : memref<16x128xbf16, #tpu.memory_space<vmem>>, vector<16x128xbf16>
    tpu.vector_store %arg4[%c0_6, %c0_7], %8 {strides = array<i32>} : memref<16x128xbf16, #tpu.memory_space<vmem>>, vector<16x128xbf16>,
    return
  }
  func.func @transform_0(%arg0: i32) -> (i32, i32) {
    %c0_i32 = arith.constant 0 : i32
    %c0_i32_0 = arith.constant 0 : i32
    return %arg0, %c0_i32 : i32, i32
  }
  func.func @transform_1(%arg0: i32) -> (i32, i32) {
    %c0_i32 = arith.constant 0 : i32
    %c0_i32_0 = arith.constant 0 : i32
    %c0_i32_1 = arith.constant 0 : i32
    return %c0_i32, %c0_i32_0 : i32, i32
  }
  func.func @transform_2(%arg0: i32) -> (i32, i32) {
    %c0_i32 = arith.constant 0 : i32
    %c0_i32_0 = arith.constant 0 : i32
    %c0_i32_1 = arith.constant 0 : i32
    return %c0_i32, %c0_i32_0 : i32, i32
  }
  func.func @transform_3(%arg0: i32) -> (i32, i32) {
    %c0_i32 = arith.constant 0 : i32
    %c0_i32_0 = arith.constant 0 : i32
    return %arg0, %c0_i32 : i32, i32
  }
}

</mosaic_0001>

<llo_original>
// kernel: tpu_custom_call.1
$region0: #{tpu_custom_call.1}
  #allocation0 [shape = 'u32[]', space=smem, size = 0x4, offset = 0x4, fixed_abs, tag = 'smem constant byte address 0x4 - core index']
  #allocation1 [shape = 'u32[144,128]{1,0:T(1,128)}', space=vmem, size = 0x12000, scoped, tag = 'internal scratch']
  %s0 = inlined_call_operand.vmem [shape: f32[16,32], index: 0, kind: input, shape index: {}]
  %s1 = inlined_call_operand.vmem [shape: f32[128,32], index: 1, kind: input, shape index: {}]
  %s2 = inlined_call_operand.vmem [shape: f32[1,128], index: 2, kind: input, shape index: {}]
  %s3 = inlined_call_operand.hbm [shape: bf16[16,128], index: 3, kind: output, shape index: {}]
  %s4 = sld [smem:[#allocation0]]
  $region22: #{tpu_custom_call.1} parent=0
    _
  %s6 = ssub.s32 1, %s4
  %s7 = scalar_select 0, %s6, %s4
  $region1: #{tpu_custom_call.1} parent=0
    #allocation2 [shape = 'u8[4096]{0}', space=vmem, size = 0x1000, scoped, tag = 'output window, operand 0, single buffered']
    #allocation3 [shape = 's32[1]{0}', space=sflag, size = 0x4, scoped, tag = 'scoped memory for tpu_custom_call.1']
    %8 = vsyncpa [#allocation3], 0
    // Predicated region
    $region2: #{tpu_custom_call.1} parent=1 // pred_check
      _
    $region3: #{tpu_custom_call.1} parent=1 // pred_check_branch
      %10 = sbr.rel (0) target = $region5
    $region4: #{tpu_custom_call.1} parent=1 // pred_region
      _
    $region5: #{tpu_custom_call.1} parent=1 // pred_fallthru
      _
    // Predicated region
    $region6: #{tpu_custom_call.1} parent=1 // pred_check
      _
    $region7: #{tpu_custom_call.1} parent=1 // pred_check_branch
      %12 = sbr.rel (0) target = $region9
    $region8: #{tpu_custom_call.1} parent=1 // pred_region
      _
    $region9: #{tpu_custom_call.1} parent=1 // pred_fallthru
      _
    // Predicated region
    $region10: #{tpu_custom_call.1} parent=1 // pred_check
      _
    $region11: #{tpu_custom_call.1} parent=1 // pred_check_branch
      %14 = sbr.rel (0) target = $region13
    $region12: #{tpu_custom_call.1} parent=1 // pred_region
      _
    $region13: #{tpu_custom_call.1} parent=1 // pred_fallthru
      _
    %v15 = vld [vmem:[%s0] sm:$0xff]
    %v16 = vld [vmem:[%s0 + $0x8] sm:$0xff]
    %v17 = vld [vmem:[%s1] sm:$0xff]
    %v18 = vld [vmem:[%s1 + $0x8] sm:$0xff]
    %v19 = vld [vmem:[%s1 + $0x10] sm:$0xff]
    %v20 = vld [vmem:[%s1 + $0x18] sm:$0xff]
    %v21 = vld [vmem:[%s1 + $0x20] sm:$0xff]
    %v22 = vld [vmem:[%s1 + $0x28] sm:$0xff]
    %v23 = vld [vmem:[%s1 + $0x30] sm:$0xff]
    %v24 = vld [vmem:[%s1 + $0x38] sm:$0xff]
    %v25 = vld [vmem:[%s1 + $0x40] sm:$0xff]
    %v26 = vld [vmem:[%s1 + $0x48] sm:$0xff]
    %v27 = vld [vmem:[%s1 + $0x50] sm:$0xff]
    %v28 = vld [vmem:[%s1 + $0x58] sm:$0xff]
    %v29 = vld [vmem:[%s1 + $0x60] sm:$0xff]
    %v30 = vld [vmem:[%s1 + $0x68] sm:$0xff]
    %v31 = vld [vmem:[%s1 + $0x70] sm:$0xff]
    %v32 = vld [vmem:[%s1 + $0x78] sm:$0xff]
    %v33 = vld [vmem:[%s2] sm:$0x1]
    %v35 = vlaneseq
    %v36 = vshrl.u32 %v35, 7
    %v37 = vsub.s32 0, %v36
    %v38 = vrot.slane %v33, %v37
    %vm40 = vcmask 261120
    %v42 = vsel %vm40, %v15, 0
    %v45 = vsel %vm40, %v16, 0
    %v48 = vsel %vm40, %v17, 0
    %v51 = vsel %vm40, %v18, 0
    %v54 = vsel %vm40, %v19, 0
    %v57 = vsel %vm40, %v20, 0
    %v60 = vsel %vm40, %v21, 0
    %v63 = vsel %vm40, %v22, 0
    %v66 = vsel %vm40, %v23, 0
    %v69 = vsel %vm40, %v24, 0
    %v72 = vsel %vm40, %v25, 0
    %v75 = vsel %vm40, %v26, 0
    %v78 = vsel %vm40, %v27, 0
    %v81 = vsel %vm40, %v28, 0
    %v84 = vsel %vm40, %v29, 0
    %v87 = vsel %vm40, %v30, 0
    %v90 = vsel %vm40, %v31, 0
    %v93 = vsel %vm40, %v32, 0
    %95 = vmatprep.subr.mxu0 0.0
    %96 = vmatpush1.xpose.msra.mxu0 %v93
    %97 = vmatprep.subr.mxu0 0.0
    %98 = vmatpush1.xpose.msra.mxu0 %v90
    %99 = vmatprep.subr.mxu0 0.0
    %100 = vmatpush1.xpose.msra.mxu0 %v87
    %101 = vmatprep.subr.mxu0 0.0
    %102 = vmatpush1.xpose.msra.mxu0 %v84
    %103 = vmatprep.subr.mxu0 0.0
    %104 = vmatpush1.xpose.msra.mxu0 %v81
    %105 = vmatprep.subr.mxu0 0.0
    %106 = vmatpush1.xpose.msra.mxu0 %v78
    %107 = vmatprep.subr.mxu0 0.0
    %108 = vmatpush1.xpose.msra.mxu0 %v75
    %109 = vmatprep.subr.mxu0 0.0
    %110 = vmatpush1.xpose.msra.mxu0 %v72
    %111 = vmatprep.subr.mxu0 0.0
    %112 = vmatpush1.xpose.msra.mxu0 %v69
    %113 = vmatprep.subr.mxu0 0.0
    %114 = vmatpush1.xpose.msra.mxu0 %v66
    %115 = vmatprep.subr.mxu0 0.0
    %116 = vmatpush1.xpose.msra.mxu0 %v63
    %117 = vmatprep.subr.mxu0 0.0
    %118 = vmatpush1.xpose.msra.mxu0 %v60
    %119 = vmatprep.subr.mxu0 0.0
    %120 = vmatpush1.xpose.msra.mxu0 %v57
    %121 = vmatprep.subr.mxu0 0.0
    %122 = vmatpush1.xpose.msra.mxu0 %v54
    %123 = vmatprep.subr.mxu0 0.0
    %124 = vmatpush1.xpose.msra.mxu0 %v51
    %125 = vmatprep.subr.mxu0 0.0
    %126 = vmatpush1.xpose.msra.mxu0 %v48
    %127 = vmatprep.subr.mxu0 0.0
    %128 = vmatpush2.xpose.msra.mxu0 0.0
    %129 = vmatprep.subr.mxu0 0.0
    %130 = vmatpush2.xpose.msra.mxu0 0.0
    %131 = vmatprep.subr.mxu0 0.0
    %132 = vmatpush2.xpose.msra.mxu0 0.0
    %133 = vmatprep.subr.mxu0 0.0
    %134 = vmatpush2.xpose.msra.mxu0 0.0
    %135 = vmatprep.subr.mxu0 0.0
    %136 = vmatpush2.xpose.msra.mxu0 0.0
    %137 = vmatprep.subr.mxu0 0.0
    %138 = vmatpush2.xpose.msra.mxu0 0.0
    %139 = vmatprep.subr.mxu0 0.0
    %140 = vmatpush2.xpose.msra.mxu0 0.0
    %141 = vmatprep.subr.mxu0 0.0
    %142 = vmatpush2.xpose.msra.mxu0 0.0
    %143 = vmatprep.subr.mxu0 0.0
    %144 = vmatpush2.xpose.msra.mxu0 0.0
    %145 = vmatprep.subr.mxu0 0.0
    %146 = vmatpush2.xpose.msra.mxu0 0.0
    %147 = vmatprep.subr.mxu0 0.0
    %148 = vmatpush2.xpose.msra.mxu0 0.0
    %149 = vmatprep.subr.mxu0 0.0
    %150 = vmatpush2.xpose.msra.mxu0 0.0
    %151 = vmatprep.subr.mxu0 0.0
    %152 = vmatpush2.xpose.msra.mxu0 0.0
    %153 = vmatprep.subr.mxu0 0.0
    %154 = vmatpush2.xpose.msra.mxu0 0.0
    %155 = vmatprep.subr.mxu0 0.0
    %156 = vmatpush2.xpose.msra.mxu0 0.0
    %157 = vmatprep.subr.mxu0 0.0
    %158 = vmatpush2.xpose.msra.mxu0 0.0
    %159 = vmatprep.mubr.f32.mxu0 0.0
    %160 = vmatmul.mubr.f32.gmra.mxu0 %v42
    %v161 = vpop.f32.mrf.mxu0
    %v162 = vadd.f32 %v38, %v161
    %v163 = vpop.f32.mrf.mxu0
    %164 = vmatprep.mubr.f32.mxu0 0.0
    %165 = vmatmul.mubr.f32.gmra.mxu0 %v45
    %v166 = vpop.f32.mrf.mxu0
    %v167 = vadd.f32 %v38, %v166
    %v168 = vpop.f32.mrf.mxu0
    %169 = vdwg.mxu0
    %v170 = vmul.f32 %v162, 0.17677669
    %v171 = vmul.f32 %v167, 0.17677669
    %v172 = vpack.c.bf16 %v171, %v170
    %v174 = vunpack.c.l.b16 %v172
    %v175 = vunpack.c.h.b16 %v172
    %v176 = vpack.c.b16 %v174, %v174
    %v177 = vpack.c.b16 %v175, %v175
    %180 = vst [vmem:[#allocation2] sm:$0xf] %v176
    %181 = vst [vmem:[#allocation2 + $0x4] sm:$0xf] %v177
    // Predicated region
    $region14: #{tpu_custom_call.1} parent=1 // pred_check
      _
    $region15: #{tpu_custom_call.1} parent=1 // pred_check_branch
      %183 = sbr.rel (0) target = $region17
    $region16: #{tpu_custom_call.1} parent=1 // pred_region
      %s185 = ssub.s32 128, 128
      %186 = vsyncadd [#allocation3], %s185
      %s187 = sshll.u32 [#allocation2], 4
      %s188 = int_to_ptr.vmem [resolvable:$true] %s187
      %193 = dma.vmem_to_hbm [thread:$0]  %s188, 128, %s3, [#allocation3], 64, 64, 4
    $region17: #{tpu_custom_call.1} parent=1 // pred_fallthru
      _
    // Predicated region
    $region18: #{tpu_custom_call.1} parent=1 // pred_check
      _
    $region19: #{tpu_custom_call.1} parent=1 // pred_check_branch
      %195 = sbr.rel (0) target = $region21
    $region20: #{tpu_custom_call.1} parent=1 // pred_region
      %196 = dma.done [#allocation3], 128
    $region21: #{tpu_custom_call.1} parent=1 // pred_fallthru
      _
    %197 = vsyncpa [#allocation3], 1

</llo_original>
